<compile_context>
chip_gen: v5e
topology: v5e:2x2
jax: 0.10.0
libtpu: 0.0.40
codegen_flags: <defaults>
</compile_context>

<pallas_src>
import functools
import math

import jax
import jax.numpy as jnp
from jax.experimental import pallas as pl
from jax.experimental.pallas import tpu as pltpu


def _round_up(x: int, m: int) -> int:
    return ((x + m - 1) // m) * m


def _sinusoidal_kernel(t_ref, freq_ref, cmask_ref, o_ref, *, groups: int):
    # t_ref:     (TB, g)  f32 -- g consecutive timesteps packed per output row
    # freq_ref:  (g, P)   f32 -- row k holds freq_dim on lane-group k, 0 elsewhere
    # cmask_ref: (1, P)   f32 -- 1.0 on cos lanes, 0.0 on sin lanes
    # o_ref:     (TB, P)  f32 -- P = g * dim (lane-dense)
    #
    # Expand each timestep across its dim-wide lane group and scale by the
    # frequency table in one broadcast-multiply-accumulate.  Every lane gets
    # exactly one non-zero contribution, so `scaled` is bit-exact f32
    # t[b] * freq[j], identical to the reference formulation.
    scaled = t_ref[:, 0:1] * freq_ref[0:1, :]
    for k in range(1, groups):  # groups is a small static int -> unrolled
        scaled = scaled + t_ref[:, k:k + 1] * freq_ref[k:k + 1, :]

    s = jnp.sin(scaled)
    c = jnp.cos(scaled)
    # Single lane-dense store; no concatenate along the lane axis.
    o_ref[...] = jnp.where(cmask_ref[...] > 0.5, c, s)


def sinusoidal_position_embeddings(time: jax.Array, dim: int,
                                    *, max_block_rows: int = 512,
                                    out_block_bytes: int = 2 << 20) -> jax.Array:
    """Equivalent of SinusoidalPositionEmbeddings(dim)(time).

    time: (B,) float array.  Returns (B, dim) float32.
    """
    assert time.ndim == 1, "time must be a 1-D tensor of timesteps"
    # Guard the latent bug of the PyTorch module: dim==2 divides by zero,
    # odd dim silently drops a column.
    assert dim % 2 == 0 and dim >= 4, "dim must be even and >= 4"

    b = time.shape[0]
    half_dim = dim // 2
    scale = math.log(10000.0) / (half_dim - 1)

    # ---- constant tables (depend only on dim); built once, outside the kernel ----
    base = jnp.exp(jnp.arange(half_dim, dtype=jnp.float32) * -scale)      # (half,)
    freq_dim = jnp.concatenate([base, base])                              # (dim,)
    cmask_dim = jnp.concatenate([jnp.zeros((half_dim,), jnp.float32),
                                 jnp.ones((half_dim,), jnp.float32)])     # (dim,)

    # ---- lane packing: make the output's last dim >= 128 where possible ----
    g = (128 // dim) if (dim < 128 and 128 % dim == 0) else 1
    packed_dim = g * dim

    # freq_groups[k, j] = freq_dim[j % dim] if (j // dim == k) else 0
    freq_groups = jnp.kron(jnp.eye(g, dtype=jnp.float32), freq_dim[None, :])  # (g, P)
    cos_mask = jnp.tile(cmask_dim, (g,))[None, :]                             # (1, P)

    # ---- batch tiling in packed-row space (multiple of 8, bounded VMEM block) ----
    rows_needed = pl.cdiv(b, g)
    rows8 = _round_up(rows_needed, 8)
    tb = min(max_block_rows, max(8, (out_block_bytes // (packed_dim * 4)) // 8 * 8))
    tb = min(tb, rows8)
    rows = _round_up(rows8, tb)
    bp = rows * g

    t = time.astype(jnp.float32)
    if bp != b:
        t = jnp.pad(t, (0, bp - b))
    t_packed = t.reshape(rows, g)

    kernel = functools.partial(_sinusoidal_kernel, groups=g)
    out_packed = pl.pallas_call(
        kernel,
        out_shape=jax.ShapeDtypeStruct((rows, packed_dim), jnp.float32),
        grid=(rows // tb,),
        in_specs=[
            pl.BlockSpec((tb, g), lambda i: (i, 0)),           # timesteps (tiled)
            pl.BlockSpec((g, packed_dim), lambda i: (0, 0)),   # freq table (resident)
            pl.BlockSpec((1, packed_dim), lambda i: (0, 0)),   # cos-lane mask (resident)
        ],
        out_specs=pl.BlockSpec((tb, packed_dim), lambda i: (i, 0)),
        compiler_params=pltpu.CompilerParams(
            dimension_semantics=("parallel",),   # independent batch tiles -> v7x dual-TC
        ),
    )(t_packed, freq_groups, cos_mask)

    # Row-major unpack (free reshape) and drop batch padding.
    return out_packed.reshape(bp, dim)[:b]


def _reference(time: jax.Array, dim: int) -> jax.Array:
    """Pure-JAX reference mirroring the PyTorch forward exactly."""
    half_dim = dim // 2
    scale = math.log(10000.0) / (half_dim - 1)
    freqs = jnp.exp(jnp.arange(half_dim, dtype=jnp.float32) * -scale)
    emb = time.astype(jnp.float32)[:, None] * freqs[None, :]
    return jnp.concatenate([jnp.sin(emb), jnp.cos(emb)], axis=-1)


if __name__ == "__main__":
    key = jax.random.PRNGKey(0)

    # Primary (module-consistent) shape: diffusion timestep embedding.
    batch, dim = 8, 32
    time = jax.random.uniform(key, (batch,), dtype=jnp.float32) * 1000.0
    out = jax.block_until_ready(sinusoidal_position_embeddings(time, dim))
    ref = _reference(time, dim)
    assert out.shape == (batch, dim)
    assert jnp.allclose(out, ref, atol=1e-5, rtol=1e-5), "mismatch vs reference (8,32)"

    # Extra small checks: batch padding (g=2 packing) and the dim>=128 (g=1) path.
    for (b2, d2) in ((37, 64), (16, 256)):
        t2 = jax.random.uniform(jax.random.PRNGKey(1), (b2,), dtype=jnp.float32) * 1000.0
        o2 = jax.block_until_ready(sinusoidal_position_embeddings(t2, d2))
        r2 = _reference(t2, d2)
        assert o2.shape == (b2, d2)
        assert jnp.allclose(o2, r2, atol=1e-5, rtol=1e-5), f"mismatch vs reference {(b2, d2)}"

    print("KERNEL_OK")
</pallas_src>

<mosaic_0001>
module attributes {stable_mosaic.version = 11 : i64} {
  func.func @_sinusoidal_kernel(%arg0: i32, %arg1: memref<8x4xf32, #tpu.memory_space<vmem>>, %arg2: memref<4x128xf32, #tpu.memory_space<vmem>>, %arg3: memref<1x128xf32, #tpu.memory_space<vmem>>, %arg4: memref<8x128xf32, #tpu.memory_space<vmem>>) attributes {dimension_semantics = [#tpu.dimension_semantics<parallel>], iteration_bounds = array<i64: 1>, scalar_prefetch = 0 : i64, scratch_operands = 0 : i64, tpu.core_type = #tpu.core_type<tc>, window_params = [{transform_indices = @transform_0, window_bounds = array<i64: 8, 4>}, {pipeline_mode = #tpu.pipeline_mode<synchronous>, transform_indices = @transform_1, window_bounds = array<i64: 4, 128>}, {pipeline_mode = #tpu.pipeline_mode<synchronous>, transform_indices = @transform_2, window_bounds = array<i64: 1, 128>}, {transform_indices = @transform_3, window_bounds = array<i64: 8, 128>}]} {
    %c0 = arith.constant 0 : index
    %c0_0 = arith.constant 0 : index
    %0 = vector.load %arg1[%c0, %c0_0] : memref<8x4xf32, #tpu.memory_space<vmem>>, vector<8x1xf32>
    %c0_1 = arith.constant 0 : index
    %c0_2 = arith.constant 0 : index
    %1 = vector.load %arg2[%c0_1, %c0_2] : memref<4x128xf32, #tpu.memory_space<vmem>>, vector<1x128xf32>
    %2 = vector.broadcast %0 : vector<8x1xf32> to vector<8x128xf32>
    %3 = vector.broadcast %1 : vector<1x128xf32> to vector<8x128xf32>
    %4 = arith.mulf %2, %3 : vector<8x128xf32>
    %c0_3 = arith.constant 0 : index
    %c1 = arith.constant 1 : index
    %5 = vector.load %arg1[%c0_3, %c1] : memref<8x4xf32, #tpu.memory_space<vmem>>, vector<8x1xf32>
    %c1_4 = arith.constant 1 : index
    %c0_5 = arith.constant 0 : index
    %6 = vector.load %arg2[%c1_4, %c0_5] : memref<4x128xf32, #tpu.memory_space<vmem>>, vector<1x128xf32>
    %7 = vector.broadcast %5 : vector<8x1xf32> to vector<8x128xf32>
    %8 = vector.broadcast %6 : vector<1x128xf32> to vector<8x128xf32>
    %9 = arith.mulf %7, %8 : vector<8x128xf32>
    %10 = arith.addf %4, %9 : vector<8x128xf32>
    %c0_6 = arith.constant 0 : index
    %c2 = arith.constant 2 : index
    %11 = vector.load %arg1[%c0_6, %c2] : memref<8x4xf32, #tpu.memory_space<vmem>>, vector<8x1xf32>
    %c2_7 = arith.constant 2 : index
    %c0_8 = arith.constant 0 : index
    %12 = vector.load %arg2[%c2_7, %c0_8] : memref<4x128xf32, #tpu.memory_space<vmem>>, vector<1x128xf32>
    %13 = vector.broadcast %11 : vector<8x1xf32> to vector<8x128xf32>
    %14 = vector.broadcast %12 : vector<1x128xf32> to vector<8x128xf32>
    %15 = arith.mulf %13, %14 : vector<8x128xf32>
    %16 = arith.addf %10, %15 : vector<8x128xf32>
    %c0_9 = arith.constant 0 : index
    %c3 = arith.constant 3 : index
    %17 = vector.load %arg1[%c0_9, %c3] : memref<8x4xf32, #tpu.memory_space<vmem>>, vector<8x1xf32>
    %c3_10 = arith.constant 3 : index
    %c0_11 = arith.constant 0 : index
    %18 = vector.load %arg2[%c3_10, %c0_11] : memref<4x128xf32, #tpu.memory_space<vmem>>, vector<1x128xf32>
    %19 = vector.broadcast %17 : vector<8x1xf32> to vector<8x128xf32>
    %20 = vector.broadcast %18 : vector<1x128xf32> to vector<8x128xf32>
    %21 = arith.mulf %19, %20 : vector<8x128xf32>
    %22 = arith.addf %16, %21 : vector<8x128xf32>
    %23 = math.sin %22 : vector<8x128xf32>
    %24 = math.cos %22 : vector<8x128xf32>
    %c0_12 = arith.constant 0 : index
    %c0_13 = arith.constant 0 : index
    %25 = vector.load %arg3[%c0_12, %c0_13] : memref<1x128xf32, #tpu.memory_space<vmem>>, vector<1x128xf32>
    %cst = arith.constant 5.000000e-01 : f32
    %26 = vector.broadcast %cst : f32 to vector<1x128xf32>
    %27 = arith.cmpf ogt, %25, %26 : vector<1x128xf32>
    %28 = vector.shape_cast %27 : vector<1x128xi1> to vector<1x128xi1>
    %29 = vector.broadcast %28 : vector<1x128xi1> to vector<8x128xi1>
    %30 = arith.select %29, %24, %23 : vector<8x128xi1>, vector<8x128xf32>
    %c0_14 = arith.constant 0 : index
    %c0_15 = arith.constant 0 : index
    %31 = vector.load %arg4[%c0_14, %c0_15] : memref<8x128xf32, #tpu.memory_space<vmem>>, vector<8x128xf32>
    tpu.vector_store %arg4[%c0_14, %c0_15], %30 {strides = array<i32>} : memref<8x128xf32, #tpu.memory_space<vmem>>, vector<8x128xf32>,
    return
  }
  func.func @transform_0(%arg0: i32) -> (i32, i32) {
    %c0_i32 = arith.constant 0 : i32
    %c0_i32_0 = arith.constant 0 : i32
    return %arg0, %c0_i32 : i32, i32
  }
  func.func @transform_1(%arg0: i32) -> (i32, i32) {
    %c0_i32 = arith.constant 0 : i32
    %c0_i32_0 = arith.constant 0 : i32
    %c0_i32_1 = arith.constant 0 : i32
    return %c0_i32, %c0_i32_0 : i32, i32
  }
  func.func @transform_2(%arg0: i32) -> (i32, i32) {
    %c0_i32 = arith.constant 0 : i32
    %c0_i32_0 = arith.constant 0 : i32
    %c0_i32_1 = arith.constant 0 : i32
    return %c0_i32, %c0_i32_0 : i32, i32
  }
  func.func @transform_3(%arg0: i32) -> (i32, i32) {
    %c0_i32 = arith.constant 0 : i32
    %c0_i32_0 = arith.constant 0 : i32
    return %arg0, %c0_i32 : i32, i32
  }
}

</mosaic_0001>

<llo_original>
// kernel: tpu_custom_call.1
$region0: #{tpu_custom_call.1}
  #allocation0 [shape = 'u32[]', space=smem, size = 0x4, offset = 0x4, fixed_abs, tag = 'smem constant byte address 0x4 - core index']
  #allocation1 [shape = 'u32[72,128]{1,0:T(1,128)}', space=vmem, size = 0x9000, scoped, tag = 'internal scratch']
  %s0 = inlined_call_operand.vmem [shape: f32[8,4], index: 0, kind: input, shape index: {}]
  %s1 = inlined_call_operand.vmem [shape: f32[4,128], index: 1, kind: input, shape index: {}]
  %s2 = inlined_call_operand.vmem [shape: f32[1,128], index: 2, kind: input, shape index: {}]
  %s3 = inlined_call_operand.hbm [shape: f32[8,128], index: 3, kind: output, shape index: {}]
  %s4 = sld [smem:[#allocation0]]
  $region22: #{tpu_custom_call.1} parent=0
    _
  %s6 = ssub.s32 1, %s4
  %s7 = scalar_select 0, %s6, %s4
  $region1: #{tpu_custom_call.1} parent=0
    #allocation2 [shape = 'u8[4096]{0}', space=vmem, size = 0x1000, scoped, tag = 'output window, operand 0, single buffered']
    #allocation3 [shape = 's32[1]{0}', space=sflag, size = 0x4, scoped, tag = 'scoped memory for tpu_custom_call.1']
    %8 = vsyncpa [#allocation3], 0
    // Predicated region
    $region2: #{tpu_custom_call.1} parent=1 // pred_check
      _
    $region3: #{tpu_custom_call.1} parent=1 // pred_check_branch
      %10 = sbr.rel (0) target = $region5
    $region4: #{tpu_custom_call.1} parent=1 // pred_region
      _
    $region5: #{tpu_custom_call.1} parent=1 // pred_fallthru
      _
    // Predicated region
    $region6: #{tpu_custom_call.1} parent=1 // pred_check
      _
    $region7: #{tpu_custom_call.1} parent=1 // pred_check_branch
      %12 = sbr.rel (0) target = $region9
    $region8: #{tpu_custom_call.1} parent=1 // pred_region
      _
    $region9: #{tpu_custom_call.1} parent=1 // pred_fallthru
      _
    // Predicated region
    $region10: #{tpu_custom_call.1} parent=1 // pred_check
      _
    $region11: #{tpu_custom_call.1} parent=1 // pred_check_branch
      %14 = sbr.rel (0) target = $region13
    $region12: #{tpu_custom_call.1} parent=1 // pred_region
      _
    $region13: #{tpu_custom_call.1} parent=1 // pred_fallthru
      _
    %v15 = vld [vmem:[%s0] sm:$0xff]
    %v16 = vld [vmem:[%s1] sm:$0x1]
    %18 = vset.pattern.permute.xlu0 0
    %19 = vperm.xlu0 %18, %v15
    %v20 = vpop.permute.xlu0 %19
    %v22 = vperm.slane %v16, 0
    %v23 = vmul.f32 %v20, %v22
    %v24 = vld [vmem:[%s1 + $0x1] sm:$0x1]
    %25 = vset.pattern.permute.xlu0 1
    %26 = vperm.xlu0 %25, %v15
    %v27 = vpop.permute.xlu0 %26
    %v29 = vperm.slane %v24, 0
    %v30 = vmul.f32 %v27, %v29
    %v31 = vadd.f32 %v23, %v30
    %v32 = vld [vmem:[%s1 + $0x2] sm:$0x1]
    %33 = vset.pattern.permute.xlu0 2
    %34 = vperm.xlu0 %33, %v15
    %v35 = vpop.permute.xlu0 %34
    %v37 = vperm.slane %v32, 0
    %v38 = vmul.f32 %v35, %v37
    %v39 = vadd.f32 %v31, %v38
    %v40 = vld [vmem:[%s1 + $0x3] sm:$0x1]
    %41 = vset.pattern.permute.xlu0 3
    %42 = vperm.xlu0 %41, %v15
    %v43 = vpop.permute.xlu0 %42
    %v45 = vperm.slane %v40, 0
    %v46 = vmul.f32 %v43, %v45
    %v47 = vadd.f32 %v39, %v46
    %v48 = vand.u32 2147483647, %v47
    %vm49 = vcmp.le.f32.partialorder %v48, 0.7853982
    %vm50 = vcmp.lt.s32.totalorder %v47, 0
    %v51 = vand.u32 %v47, 2139095040
    %v52 = vshrl.u32 %v51, 23
    %v53 = vsub.s32 %v52, 127
    %v54 = vand.u32 2147483647, %v47
    %v55 = vand.u32 %v54, 8388607
    %v56 = vor.u32 %v55, 8388608
    %v57 = vsub.s32 0, %v56
    %v58 = vadd.s32 %v53, 1
    %vm59 = vcmp.gt.s32.totalorder %v58, 0
    %v60 = vsel %vm59, %v58, 0
    %v61 = vshrl.u32 %v60, 5
    %v62 = vand.u32 %v60, 31
    %v63 = vsub.s32 32, %v62
    %v64 = vshrl.u32 683565275, %v63
    %v65 = vshll.u32 683565275, %v62
    %v66 = vshrl.u32 2475754826, %v63
    %v67 = vor.u32 %v65, %v66
    %v68 = vshll.u32 2475754826, %v62
    %v69 = vshrl.u32 2131351028, %v63
    %v70 = vor.u32 %v68, %v69
    %v71 = vshll.u32 2131351028, %v62
    %v72 = vshrl.u32 2102212464, %v63
    %v73 = vor.u32 %v71, %v72
    %v74 = vshll.u32 2102212464, %v62
    %v75 = vshrl.u32 920167782, %v63
    %v76 = vor.u32 %v74, %v75
    %v77 = vshll.u32 920167782, %v62
    %v78 = vshrl.u32 1326507024, %v63
    %v79 = vor.u32 %v77, %v78
    %vm80 = vcmp.lt.s32.totalorder %v61, 1
    %vm81 = vcmp.lt.s32.totalorder %v61, 2
    %vm82 = vcmp.lt.s32.totalorder %v61, 3
    %vm83 = vcmp.lt.s32.totalorder %v61, 4
    %v84 = vsel %vm80, %v64, %v67
    %v85 = vsel %vm83, %v73, 2102212464
    %v86 = vsel %vm82, %v70, %v85
    %v87 = vsel %vm81, %v84, %v86
    %v88 = vsel %vm80, %v67, %v70
    %v89 = vsel %vm83, %v76, 920167782
    %v90 = vsel %vm82, %v73, %v89
    %v91 = vsel %vm81, %v88, %v90
    %v92 = vsel %vm80, %v70, %v73
    %v93 = vsel %vm83, %v79, 1326507024
    %v94 = vsel %vm82, %v76, %v93
    %v95 = vsel %vm81, %v92, %v94
    %v96 = vshll.u32 %v56, 8
    %v97 = vand.u32 %v96, 65535
    %v98 = vshrl.u32 %v96, 16
    %v99 = vand.u32 %v95, 65535
    %v100 = vshrl.u32 %v95, 16
    %v101 = vmul.u32 %v97, %v99
    %v102 = vmul.u32 %v97, %v100
    %v103 = vmul.u32 %v98, %v99
    %v104 = vmul.u32 %v98, %v100
    %v105 = vshll.u32 %v102, 16
    %v106 = vshrl.u32 %v102, 16
    %v107 = vshll.u32 %v103, 16
    %v108 = vshrl.u32 %v103, 16
    %vm109 = vc.u32 %v101, %v105
    %v110 = vsel %vm109, 1, 0
    %v111 = vadd.s32 %v101, %v105
    %v112 = vadd.s32 %v104, %v110
    %vm113 = vc.u32 %v111, %v107
    %v114 = vsel %vm113, 1, 0
    %v115 = vadd.s32 %v111, %v107
    %v116 = vadd.s32 %v112, %v114
    %v117 = vadd.s32 %v116, %v106
    %v118 = vadd.s32 %v117, %v108
    %v119 = vand.u32 %v96, 65535
    %v120 = vshrl.u32 %v96, 16
    %v121 = vand.u32 %v91, 65535
    %v122 = vshrl.u32 %v91, 16
    %v123 = vmul.u32 %v119, %v121
    %v124 = vmul.u32 %v119, %v122
    %v125 = vmul.u32 %v120, %v121
    %v126 = vmul.u32 %v120, %v122
    %v127 = vshll.u32 %v124, 16
    %v128 = vshrl.u32 %v124, 16
    %v129 = vshll.u32 %v125, 16
    %v130 = vshrl.u32 %v125, 16
    %vm131 = vc.u32 %v123, %v127
    %v132 = vsel %vm131, 1, 0
    %v133 = vadd.s32 %v123, %v127
    %v134 = vadd.s32 %v126, %v132
    %vm135 = vc.u32 %v133, %v129
    %v136 = vsel %vm135, 1, 0
    %v137 = vadd.s32 %v133, %v129
    %v138 = vadd.s32 %v134, %v136
    %v139 = vadd.s32 %v138, %v128
    %v140 = vadd.s32 %v139, %v130
    %v141 = vmul.u32 %v96, %v87
    %v142 = vadd.s32 %v118, %v137
    %vm143 = vc.u32 %v118, %v137
    %v144 = vadd.s32 %v140, 1
    %v145 = vsel %vm143, %v144, %v140
    %v146 = vadd.s32 %v141, %v145
    %v147 = vadd.s32 %v146, 536870912
    %v148 = vshrl.u32 %v147, 30
    %v149 = vshll.u32 %v148, 30
    %v150 = vsub.s32 %v146, %v149
    %vm151 = vcmp.lt.s32.totalorder %v150, 0
    %v152 = vsub.s32 0, %v150
    %v153 = vsel %vm151, %v152, %v150
    %v154 = vclz %v153
    %v155 = vsub.s32 %v154, 2
    %vm156 = vcmp.gt.s32.totalorder 0, %v155
    %v157 = vsel %vm156, 0, %v155
    %v158 = vsub.s32 32, %v157
    %v159 = vshll.u32 %v150, %v157
    %v160 = vshrl.u32 %v142, %v158
    %v161 = vor.u32 %v159, %v160
    %v162 = vsub.s32 4294967266, %v157
    %v163 = vadd.s32 %v162, 127
    %v164 = vshll.u32 %v163, 23
    %v165 = vor.u32 4788187, %v164
    %v166 = vand.u32 2147483647, %v165
    %v168 = vcvt.s32.f32 %v161
    %v169 = vmul.f32 %v168, %v166
    %v170 = vxor.u32 %v169, 2147483648
    %v171 = vsel %vm50, %v170, %v169
    %v172 = vsub.s32 4, %v148
    %v173 = vsel %vm50, %v172, %v148
    %v174 = vsel %vm49, %v47, %v171
    %v175 = vsel %vm49, 0, %v173
    %v176 = vmul.f32 %v174, %v174
    %v177 = vmul.f32 %v176, -0.001358992
    %v178 = vadd.f32 %v177, 0.041655596
    %v179 = vmul.f32 %v176, %v178
    %v180 = vadd.f32 %v179, -0.4999988
    %v181 = vmul.f32 %v176, %v180
    %v182 = vadd.f32 1.0, %v181
    %v183 = vmul.f32 %v174, %v174
    %v184 = vmul.f32 %v183, -0.00019511016
    %v185 = vadd.f32 %v184, 0.008332121
    %v186 = vmul.f32 %v183, %v185
    %v187 = vadd.f32 %v186, -0.16666654
    %v188 = vmul.f32 %v183, %v187
    %v189 = vadd.f32 %v188, 1.0
    %v190 = vmul.f32 %v189, %v174
    %vm191 = vweird.f32 %v47
    %v192 = vadd.s32 %v175, 3
    %v193 = vand.u32 %v192, 3
    %vm194 = vcmp.lt.s32.totalorder %v193, 2
    %vm195 = vcmp.eq.s32.totalorder %v193, 0
    %v196 = vxor.u32 %v190, 2147483648
    %v197 = vsel %vm195, %v182, %v196
    %vm198 = vcmp.eq.s32.totalorder %v193, 2
    %v199 = vxor.u32 %v182, 2147483648
    %v200 = vsel %vm198, %v199, %v190
    %v201 = vsel %vm194, %v197, %v200
    %v202 = vsel %vm191, nan, %v201
    %v203 = vand.u32 2147483647, %v47
    %vm204 = vcmp.le.f32.partialorder %v203, 0.7853982
    %vm205 = vcmp.lt.s32.totalorder %v47, 0
    %v206 = vand.u32 %v47, 2139095040
    %v207 = vshrl.u32 %v206, 23
    %v208 = vsub.s32 %v207, 127
    %v209 = vand.u32 2147483647, %v47
    %v210 = vand.u32 %v209, 8388607
    %v211 = vor.u32 %v210, 8388608
    %v212 = vsub.s32 0, %v211
    %v213 = vadd.s32 %v208, 1
    %vm214 = vcmp.gt.s32.totalorder %v213, 0
    %v215 = vsel %vm214, %v213, 0
    %v216 = vshrl.u32 %v215, 5
    %v217 = vand.u32 %v215, 31
    %v218 = vsub.s32 32, %v217
    %v219 = vshrl.u32 683565275, %v218
    %v220 = vshll.u32 683565275, %v217
    %v221 = vshrl.u32 2475754826, %v218
    %v222 = vor.u32 %v220, %v221
    %v223 = vshll.u32 2475754826, %v217
    %v224 = vshrl.u32 2131351028, %v218
    %v225 = vor.u32 %v223, %v224
    %v226 = vshll.u32 2131351028, %v217
    %v227 = vshrl.u32 2102212464, %v218
    %v228 = vor.u32 %v226, %v227
    %v229 = vshll.u32 2102212464, %v217
    %v230 = vshrl.u32 920167782, %v218
    %v231 = vor.u32 %v229, %v230
    %v232 = vshll.u32 920167782, %v217
    %v233 = vshrl.u32 1326507024, %v218
    %v234 = vor.u32 %v232, %v233
    %vm235 = vcmp.lt.s32.totalorder %v216, 1
    %vm236 = vcmp.lt.s32.totalorder %v216, 2
    %vm237 = vcmp.lt.s32.totalorder %v216, 3
    %vm238 = vcmp.lt.s32.totalorder %v216, 4
    %v239 = vsel %vm235, %v219, %v222
    %v240 = vsel %vm238, %v228, 2102212464
    %v241 = vsel %vm237, %v225, %v240
    %v242 = vsel %vm236, %v239, %v241
    %v243 = vsel %vm235, %v222, %v225
    %v244 = vsel %vm238, %v231, 920167782
    %v245 = vsel %vm237, %v228, %v244
    %v246 = vsel %vm236, %v243, %v245
    %v247 = vsel %vm235, %v225, %v228
    %v248 = vsel %vm238, %v234, 1326507024
    %v249 = vsel %vm237, %v231, %v248
    %v250 = vsel %vm236, %v247, %v249
    %v251 = vshll.u32 %v211, 8
    %v252 = vand.u32 %v251, 65535
    %v253 = vshrl.u32 %v251, 16
    %v254 = vand.u32 %v250, 65535
    %v255 = vshrl.u32 %v250, 16
    %v256 = vmul.u32 %v252, %v254
    %v257 = vmul.u32 %v252, %v255
    %v258 = vmul.u32 %v253, %v254
    %v259 = vmul.u32 %v253, %v255
    %v260 = vshll.u32 %v257, 16
    %v261 = vshrl.u32 %v257, 16
    %v262 = vshll.u32 %v258, 16
    %v263 = vshrl.u32 %v258, 16
    %vm264 = vc.u32 %v256, %v260
    %v265 = vsel %vm264, 1, 0
    %v266 = vadd.s32 %v256, %v260
    %v267 = vadd.s32 %v259, %v265
    %vm268 = vc.u32 %v266, %v262
    %v269 = vsel %vm268, 1, 0
    %v270 = vadd.s32 %v266, %v262
    %v271 = vadd.s32 %v267, %v269
    %v272 = vadd.s32 %v271, %v261
    %v273 = vadd.s32 %v272, %v263
    %v274 = vand.u32 %v251, 65535
    %v275 = vshrl.u32 %v251, 16
    %v276 = vand.u32 %v246, 65535
    %v277 = vshrl.u32 %v246, 16
    %v278 = vmul.u32 %v274, %v276
    %v279 = vmul.u32 %v274, %v277
    %v280 = vmul.u32 %v275, %v276
    %v281 = vmul.u32 %v275, %v277
    %v282 = vshll.u32 %v279, 16
    %v283 = vshrl.u32 %v279, 16
    %v284 = vshll.u32 %v280, 16
    %v285 = vshrl.u32 %v280, 16
    %vm286 = vc.u32 %v278, %v282
    %v287 = vsel %vm286, 1, 0
    %v288 = vadd.s32 %v278, %v282
    %v289 = vadd.s32 %v281, %v287
    %vm290 = vc.u32 %v288, %v284
    %v291 = vsel %vm290, 1, 0
    %v292 = vadd.s32 %v288, %v284
    %v293 = vadd.s32 %v289, %v291
    %v294 = vadd.s32 %v293, %v283
    %v295 = vadd.s32 %v294, %v285
    %v296 = vmul.u32 %v251, %v242
    %v297 = vadd.s32 %v273, %v292
    %vm298 = vc.u32 %v273, %v292
    %v299 = vadd.s32 %v295, 1
    %v300 = vsel %vm298, %v299, %v295
    %v301 = vadd.s32 %v296, %v300
    %v302 = vadd.s32 %v301, 536870912
    %v303 = vshrl.u32 %v302, 30
    %v304 = vshll.u32 %v303, 30
    %v305 = vsub.s32 %v301, %v304
    %vm306 = vcmp.lt.s32.totalorder %v305, 0
    %v307 = vsub.s32 0, %v305
    %v308 = vsel %vm306, %v307, %v305
    %v309 = vclz %v308
    %v310 = vsub.s32 %v309, 2
    %vm311 = vcmp.gt.s32.totalorder 0, %v310
    %v312 = vsel %vm311, 0, %v310
    %v313 = vsub.s32 32, %v312
    %v314 = vshll.u32 %v305, %v312
    %v315 = vshrl.u32 %v297, %v313
    %v316 = vor.u32 %v314, %v315
    %v317 = vsub.s32 4294967266, %v312
    %v318 = vadd.s32 %v317, 127
    %v319 = vshll.u32 %v318, 23
    %v320 = vor.u32 4788187, %v319
    %v321 = vand.u32 2147483647, %v320
    %v323 = vcvt.s32.f32 %v316
    %v324 = vmul.f32 %v323, %v321
    %v325 = vxor.u32 %v324, 2147483648
    %v326 = vsel %vm205, %v325, %v324
    %v327 = vsub.s32 4, %v303
    %v328 = vsel %vm205, %v327, %v303
    %v329 = vsel %vm204, %v47, %v326
    %v330 = vsel %vm204, 0, %v328
    %v331 = vmul.f32 %v329, %v329
    %v332 = vmul.f32 %v331, -0.001358992
    %v333 = vadd.f32 %v332, 0.041655596
    %v334 = vmul.f32 %v331, %v333
    %v335 = vadd.f32 %v334, -0.4999988
    %v336 = vmul.f32 %v331, %v335
    %v337 = vadd.f32 1.0, %v336
    %v338 = vmul.f32 %v329, %v329
    %v339 = vmul.f32 %v338, -0.00019511016
    %v340 = vadd.f32 %v339, 0.008332121
    %v341 = vmul.f32 %v338, %v340
    %v342 = vadd.f32 %v341, -0.16666654
    %v343 = vmul.f32 %v338, %v342
    %v344 = vadd.f32 %v343, 1.0
    %v345 = vmul.f32 %v344, %v329
    %vm346 = vweird.f32 %v47
    %v347 = vand.u32 %v330, 3
    %vm348 = vcmp.lt.s32.totalorder %v347, 2
    %vm349 = vcmp.eq.s32.totalorder %v347, 0
    %v350 = vxor.u32 %v345, 2147483648
    %v351 = vsel %vm349, %v337, %v350
    %vm352 = vcmp.eq.s32.totalorder %v347, 2
    %v353 = vxor.u32 %v337, 2147483648
    %v354 = vsel %vm352, %v353, %v345
    %v355 = vsel %vm348, %v351, %v354
    %v356 = vsel %vm346, nan, %v355
    %v357 = vld [vmem:[%s2] sm:$0x1]
    %vm358 = vcmp.gt.f32.partialorder %v357, 0.5
    %v359 = vsel %vm358, 1, 0
    %v360 = vperm.slane %v359, 0
    %vm361 = vcmp.eq.s32.totalorder %v360, 1
    %v362 = vsel %vm361, %v356, %v202
    %363 = vst [vmem:[#allocation2] sm:$0xff] %v362
    // Predicated region
    $region14: #{tpu_custom_call.1} parent=1 // pred_check
      _
    $region15: #{tpu_custom_call.1} parent=1 // pred_check_branch
      %365 = sbr.rel (0) target = $region17
    $region16: #{tpu_custom_call.1} parent=1 // pred_region
      %367 = vsyncadd [#allocation3], 0
      %s369 = sshll.u32 [#allocation2], 4
      %s370 = int_to_ptr.vmem [resolvable:$true] %s369
      %s371 = sshll.u32 %s3, 4
      %s372 = int_to_ptr.hbm [resolvable:$true] %s371
      %374 = dma.vmem_to_hbm [thread:$0]  %s370, 128, %s372, [#allocation3]
    $region17: #{tpu_custom_call.1} parent=1 // pred_fallthru
      _
    // Predicated region
    $region18: #{tpu_custom_call.1} parent=1 // pred_check
      _
    $region19: #{tpu_custom_call.1} parent=1 // pred_check_branch
      %376 = sbr.rel (0) target = $region21
    $region20: #{tpu_custom_call.1} parent=1 // pred_region
      %378 = dma.done [#allocation3], 128
    $region21: #{tpu_custom_call.1} parent=1 // pred_fallthru
      _
    %379 = vsyncpa [#allocation3], 1

</llo_original>
